<compile_context>
chip_gen: v6e
topology: v6e:2x2x1
jax: 0.10.0
libtpu: 0.0.40
codegen_flags: <defaults>
</compile_context>

<pallas_src>
import functools

import jax
import jax.numpy as jnp
from jax.experimental import pallas as pl
from jax.experimental.pallas import tpu as pltpu

# ---- module hyper-parameters (from the PyTorch script) ----------------------
HIDDEN_SIZE = 2
INPUT_SIZE = 4
NUM_CLASSES = 1
NUM_LAYERS = 1          # single layer (kernel implements 1 layer exactly)
FC1_SIZE = 128


# -----------------------------------------------------------------------------
# Pallas kernel: hoisted input projection + VPU recurrence + MLP head,
# everything resident in VMEM (tiny shapes, single gridless invocation).
# -----------------------------------------------------------------------------
def _lstm1_kernel(x2d_ref,      # (T*B, I)   time-major flattened input (row = t*B + b)
                  wih_t_ref,    # (I, 4H)    W_ih^T, gate order [i, f, g, o]
                  whh_t_ref,    # (H, 4H)    W_hh^T, gate order [i, f, g, o]
                  b_ref,        # (1, 4H)    b_ih + b_hh
                  wfc1_t_ref,   # (H, F)     fc_1.weight^T
                  bfc1_ref,     # (1, F)     fc_1.bias
                  wfc_row_ref,  # (1, F)     fc.weight (row form, num_classes == 1)
                  bfc_ref,      # (1, 1)     fc.bias
                  out_ref,      # (B, 1)
                  *, seq_len, batch, hidden_size):
    T, B, H = seq_len, batch, hidden_size

    # ---- (1) Hoisted input projection: one MXU matmul for all T steps -------
    xp = jnp.dot(x2d_ref[...], wih_t_ref[...],
                 preferred_element_type=jnp.float32) + b_ref[...]       # (T*B, 4H)

    # Split per gate ONCE (off the recurrence critical path).
    xp_i = xp[:, 0 * H:1 * H]
    xp_f = xp[:, 1 * H:2 * H]
    xp_g = xp[:, 2 * H:3 * H]
    xp_o = xp[:, 3 * H:4 * H]

    # Per-gate recurrent weight rows, sliced ONCE.
    # w_rows[j][k] : (1, H) == row j of gate k's (H, H) recurrent matrix.
    whh_t = whh_t_ref[...]                                              # (H, 4H)
    w_rows = [[whh_t[j:j + 1, k * H:(k + 1) * H] for k in range(4)]
              for j in range(H)]

    h = jnp.zeros((B, H), jnp.float32)
    c = jnp.zeros((B, H), jnp.float32)

    # ---- (2) Recurrence: fully unrolled, VPU-only per-step math -------------
    for t in range(T):
        lo, hi = t * B, (t + 1) * B                  # static sublane slice

        # Recurrent contribution via broadcast-FMAs (no MXU on the chain).
        hcols = [h[:, j:j + 1] for j in range(H)]    # (B, 1) columns of h

        def rec(k):
            r = hcols[0] * w_rows[0][k]              # (B,1)*(1,H) -> (B,H)
            for j in range(1, H):
                r = r + hcols[j] * w_rows[j][k]
            return r

        pre_i = xp_i[lo:hi, :] + rec(0)
        pre_f = xp_f[lo:hi, :] + rec(1)
        pre_g = xp_g[lo:hi, :] + rec(2)
        pre_o = xp_o[lo:hi, :] + rec(3)

        i_g = jax.nn.sigmoid(pre_i)
        f_g = jax.nn.sigmoid(pre_f)
        g_g = jnp.tanh(pre_g)
        o_g = jax.nn.sigmoid(pre_o)

        c = f_g * c + i_g * g_g
        h = o_g * jnp.tanh(c)

    # ---- (3) MLP head: relu -> fc_1 -> relu -> fc ----------------------------
    hn = jnp.maximum(h, 0.0)
    z1 = jnp.dot(hn, wfc1_t_ref[...],
                 preferred_element_type=jnp.float32) + bfc1_ref[...]    # (B, F)
    z1 = jnp.maximum(z1, 0.0)
    # num_classes == 1: fold the (F,1) matmul into multiply + lane reduction.
    out = jnp.sum(z1 * wfc_row_ref[...], axis=1, keepdims=True) + bfc_ref[...]
    out_ref[...] = out.astype(out_ref.dtype)


# -----------------------------------------------------------------------------
# Wrapper: layout plumbing (flatten x time-major, pre-transpose weights).
# -----------------------------------------------------------------------------
def lstm1_forward(x, params):
    """x: (B, T, INPUT_SIZE) float32, batch-first (PyTorch convention)."""
    B, T, I = x.shape
    H = HIDDEN_SIZE
    C = NUM_CLASSES
    F = FC1_SIZE
    assert C == 1, "kernel head specialized for num_classes == 1"

    # Single cheap layout op: time-major flatten so row index = t*B + b.
    x2d = jnp.transpose(x, (1, 0, 2)).reshape(T * B, I).astype(jnp.float32)

    wih_t = params["w_ih"].T                                     # (I, 4H)
    whh_t = params["w_hh"].T                                     # (H, 4H)
    b_sum = (params["b_ih"] + params["b_hh"]).reshape(1, 4 * H)  # (1, 4H)
    wfc1_t = params["w_fc1"].T                                   # (H, F)
    bfc1 = params["b_fc1"].reshape(1, F)                         # (1, F)
    wfc_row = params["w_fc"].reshape(1, F)                       # (1, F)
    bfc = params["b_fc"].reshape(1, C)                           # (1, 1)

    kernel = functools.partial(_lstm1_kernel, seq_len=T, batch=B, hidden_size=H)
    vmem = pl.BlockSpec(memory_space=pltpu.MemorySpace.VMEM)

    return pl.pallas_call(
        kernel,
        out_shape=jax.ShapeDtypeStruct((B, C), jnp.float32),
        in_specs=[vmem] * 8,
        out_specs=vmem,
    )(x2d, wih_t, whh_t, b_sum, wfc1_t, bfc1, wfc_row, bfc)


# -----------------------------------------------------------------------------
# Pure-JAX reference (same math) for a correctness check.
# -----------------------------------------------------------------------------
def lstm1_reference(x, params):
    B, T, I = x.shape
    H = HIDDEN_SIZE
    h = jnp.zeros((B, H), jnp.float32)
    c = jnp.zeros((B, H), jnp.float32)
    b = params["b_ih"] + params["b_hh"]
    for t in range(T):
        gates = x[:, t, :] @ params["w_ih"].T + h @ params["w_hh"].T + b
        i_g = jax.nn.sigmoid(gates[:, 0 * H:1 * H])
        f_g = jax.nn.sigmoid(gates[:, 1 * H:2 * H])
        g_g = jnp.tanh(gates[:, 2 * H:3 * H])
        o_g = jax.nn.sigmoid(gates[:, 3 * H:4 * H])
        c = f_g * c + i_g * g_g
        h = o_g * jnp.tanh(c)
    hn = jnp.maximum(h, 0.0)
    z1 = jnp.maximum(hn @ params["w_fc1"].T + params["b_fc1"], 0.0)
    return z1 @ params["w_fc"].T + params["b_fc"]


# -----------------------------------------------------------------------------
# Deterministic parameter init (shapes match nn.LSTM / nn.Linear in __init__).
# -----------------------------------------------------------------------------
def init_params(key):
    H, I, C, F = HIDDEN_SIZE, INPUT_SIZE, NUM_CLASSES, FC1_SIZE
    ks = jax.random.split(key, 8)
    s_lstm = 1.0 / jnp.sqrt(H)
    s_fc1 = 1.0 / jnp.sqrt(H)
    s_fc = 1.0 / jnp.sqrt(F)
    u = lambda k, shape, s: jax.random.uniform(k, shape, jnp.float32, -s, s)
    return {
        "w_ih":  u(ks[0], (4 * H, I), s_lstm),
        "w_hh":  u(ks[1], (4 * H, H), s_lstm),
        "b_ih":  u(ks[2], (4 * H,),   s_lstm),
        "b_hh":  u(ks[3], (4 * H,),   s_lstm),
        "w_fc1": u(ks[4], (F, H),     s_fc1),
        "b_fc1": u(ks[5], (F,),       s_fc1),
        "w_fc":  u(ks[6], (C, F),     s_fc),
        "b_fc":  u(ks[7], (C,),       s_fc),
    }


if __name__ == "__main__":
    key = jax.random.PRNGKey(0)
    k_param, k_x = jax.random.split(key)

    batch, seq_len = 2, 8
    params = init_params(k_param)
    x = jax.random.normal(k_x, (batch, seq_len, INPUT_SIZE), jnp.float32)

    out = lstm1_forward(x, params)
    out = jax.block_until_ready(out)

    ref = lstm1_reference(x, params)
    assert out.shape == (batch, NUM_CLASSES)
    assert jnp.allclose(out, ref, atol=1e-5, rtol=1e-5), (out, ref)

    print("KERNEL_OK")
</pallas_src>

<mosaic_0001>
module attributes {stable_mosaic.version = 11 : i64} {
  func.func @_lstm1_kernel(%arg0: memref<16x4xf32, #tpu.memory_space<vmem>>, %arg1: memref<4x8xf32, #tpu.memory_space<vmem>>, %arg2: memref<2x8xf32, #tpu.memory_space<vmem>>, %arg3: memref<1x8xf32, #tpu.memory_space<vmem>>, %arg4: memref<2x128xf32, #tpu.memory_space<vmem>>, %arg5: memref<1x128xf32, #tpu.memory_space<vmem>>, %arg6: memref<1x128xf32, #tpu.memory_space<vmem>>, %arg7: memref<1x1xf32, #tpu.memory_space<vmem>>, %arg8: memref<2x1xf32, #tpu.memory_space<vmem>>) attributes {dimension_semantics = [], scalar_prefetch = 0 : i64, scratch_operands = 0 : i64, tpu.core_type = #tpu.core_type<tc>} {
    %c0 = arith.constant 0 : index
    %c0_0 = arith.constant 0 : index
    %0 = vector.load %arg0[%c0, %c0_0] : memref<16x4xf32, #tpu.memory_space<vmem>>, vector<16x4xf32>
    %c0_1 = arith.constant 0 : index
    %c0_2 = arith.constant 0 : index
    %1 = vector.load %arg1[%c0_1, %c0_2] : memref<4x8xf32, #tpu.memory_space<vmem>>, vector<4x8xf32>
    %cst = arith.constant dense<0.000000e+00> : vector<16x8xf32>
    %2 = tpu.matmul %0, %1, %cst {dimension_numbers = #tpu.dot_dimension_numbers<[1], [0], [0], [1], [0, 0, 1, 1], [], []>} : vector<16x4xf32>, vector<4x8xf32>, vector<16x8xf32> -> vector<16x8xf32>
    %c0_3 = arith.constant 0 : index
    %c0_4 = arith.constant 0 : index
    %3 = vector.load %arg3[%c0_3, %c0_4] : memref<1x8xf32, #tpu.memory_space<vmem>>, vector<1x8xf32>
    %4 = vector.broadcast %3 : vector<1x8xf32> to vector<16x8xf32>
    %5 = arith.addf %2, %4 : vector<16x8xf32>
    %6 = vector.extract_strided_slice %5 {offsets = [0, 0], sizes = [16, 2], strides = [1, 1]} : vector<16x8xf32> to vector<16x2xf32>
    %7 = vector.extract_strided_slice %5 {offsets = [0, 2], sizes = [16, 2], strides = [1, 1]} : vector<16x8xf32> to vector<16x2xf32>
    %8 = vector.extract_strided_slice %5 {offsets = [0, 4], sizes = [16, 2], strides = [1, 1]} : vector<16x8xf32> to vector<16x2xf32>
    %9 = vector.extract_strided_slice %5 {offsets = [0, 6], sizes = [16, 2], strides = [1, 1]} : vector<16x8xf32> to vector<16x2xf32>
    %c0_5 = arith.constant 0 : index
    %c0_6 = arith.constant 0 : index
    %10 = vector.load %arg2[%c0_5, %c0_6] : memref<2x8xf32, #tpu.memory_space<vmem>>, vector<2x8xf32>
    %11 = vector.extract_strided_slice %10 {offsets = [0, 0], sizes = [1, 2], strides = [1, 1]} : vector<2x8xf32> to vector<1x2xf32>
    %12 = vector.extract_strided_slice %10 {offsets = [0, 2], sizes = [1, 2], strides = [1, 1]} : vector<2x8xf32> to vector<1x2xf32>
    %13 = vector.extract_strided_slice %10 {offsets = [0, 4], sizes = [1, 2], strides = [1, 1]} : vector<2x8xf32> to vector<1x2xf32>
    %14 = vector.extract_strided_slice %10 {offsets = [0, 6], sizes = [1, 2], strides = [1, 1]} : vector<2x8xf32> to vector<1x2xf32>
    %15 = vector.extract_strided_slice %10 {offsets = [1, 0], sizes = [1, 2], strides = [1, 1]} : vector<2x8xf32> to vector<1x2xf32>
    %16 = vector.extract_strided_slice %10 {offsets = [1, 2], sizes = [1, 2], strides = [1, 1]} : vector<2x8xf32> to vector<1x2xf32>
    %17 = vector.extract_strided_slice %10 {offsets = [1, 4], sizes = [1, 2], strides = [1, 1]} : vector<2x8xf32> to vector<1x2xf32>
    %18 = vector.extract_strided_slice %10 {offsets = [1, 6], sizes = [1, 2], strides = [1, 1]} : vector<2x8xf32> to vector<1x2xf32>
    %cst_7 = arith.constant 0.000000e+00 : f32
    %19 = vector.broadcast %cst_7 : f32 to vector<2x2xf32>
    %cst_8 = arith.constant 0.000000e+00 : f32
    %20 = vector.broadcast %cst_8 : f32 to vector<2x2xf32>
    %21 = vector.extract_strided_slice %19 {offsets = [0, 0], sizes = [2, 1], strides = [1, 1]} : vector<2x2xf32> to vector<2x1xf32>
    %22 = vector.extract_strided_slice %19 {offsets = [0, 1], sizes = [2, 1], strides = [1, 1]} : vector<2x2xf32> to vector<2x1xf32>
    %23 = vector.extract_strided_slice %6 {offsets = [0, 0], sizes = [2, 2], strides = [1, 1]} : vector<16x2xf32> to vector<2x2xf32>
    %24 = vector.broadcast %21 : vector<2x1xf32> to vector<2x2xf32>
    %25 = vector.broadcast %11 : vector<1x2xf32> to vector<2x2xf32>
    %26 = arith.mulf %24, %25 : vector<2x2xf32>
    %27 = vector.broadcast %22 : vector<2x1xf32> to vector<2x2xf32>
    %28 = vector.broadcast %15 : vector<1x2xf32> to vector<2x2xf32>
    %29 = arith.mulf %27, %28 : vector<2x2xf32>
    %30 = arith.addf %26, %29 : vector<2x2xf32>
    %31 = arith.addf %23, %30 : vector<2x2xf32>
    %32 = vector.extract_strided_slice %7 {offsets = [0, 0], sizes = [2, 2], strides = [1, 1]} : vector<16x2xf32> to vector<2x2xf32>
    %33 = vector.broadcast %21 : vector<2x1xf32> to vector<2x2xf32>
    %34 = vector.broadcast %12 : vector<1x2xf32> to vector<2x2xf32>
    %35 = arith.mulf %33, %34 : vector<2x2xf32>
    %36 = vector.broadcast %22 : vector<2x1xf32> to vector<2x2xf32>
    %37 = vector.broadcast %16 : vector<1x2xf32> to vector<2x2xf32>
    %38 = arith.mulf %36, %37 : vector<2x2xf32>
    %39 = arith.addf %35, %38 : vector<2x2xf32>
    %40 = arith.addf %32, %39 : vector<2x2xf32>
    %41 = vector.extract_strided_slice %8 {offsets = [0, 0], sizes = [2, 2], strides = [1, 1]} : vector<16x2xf32> to vector<2x2xf32>
    %42 = vector.broadcast %21 : vector<2x1xf32> to vector<2x2xf32>
    %43 = vector.broadcast %13 : vector<1x2xf32> to vector<2x2xf32>
    %44 = arith.mulf %42, %43 : vector<2x2xf32>
    %45 = vector.broadcast %22 : vector<2x1xf32> to vector<2x2xf32>
    %46 = vector.broadcast %17 : vector<1x2xf32> to vector<2x2xf32>
    %47 = arith.mulf %45, %46 : vector<2x2xf32>
    %48 = arith.addf %44, %47 : vector<2x2xf32>
    %49 = arith.addf %41, %48 : vector<2x2xf32>
    %50 = vector.extract_strided_slice %9 {offsets = [0, 0], sizes = [2, 2], strides = [1, 1]} : vector<16x2xf32> to vector<2x2xf32>
    %51 = vector.broadcast %21 : vector<2x1xf32> to vector<2x2xf32>
    %52 = vector.broadcast %14 : vector<1x2xf32> to vector<2x2xf32>
    %53 = arith.mulf %51, %52 : vector<2x2xf32>
    %54 = vector.broadcast %22 : vector<2x1xf32> to vector<2x2xf32>
    %55 = vector.broadcast %18 : vector<1x2xf32> to vector<2x2xf32>
    %56 = arith.mulf %54, %55 : vector<2x2xf32>
    %57 = arith.addf %53, %56 : vector<2x2xf32>
    %58 = arith.addf %50, %57 : vector<2x2xf32>
    %59 = arith.negf %31 : vector<2x2xf32>
    %60 = math.exp %59 : vector<2x2xf32>
    %cst_9 = arith.constant 1.000000e+00 : f32
    %61 = vector.broadcast %cst_9 : f32 to vector<2x2xf32>
    %62 = arith.addf %61, %60 : vector<2x2xf32>
    %63 = arith.divf %61, %62 : vector<2x2xf32>
    %64 = arith.negf %40 : vector<2x2xf32>
    %65 = math.exp %64 : vector<2x2xf32>
    %cst_10 = arith.constant 1.000000e+00 : f32
    %66 = vector.broadcast %cst_10 : f32 to vector<2x2xf32>
    %67 = arith.addf %66, %65 : vector<2x2xf32>
    %68 = arith.divf %66, %67 : vector<2x2xf32>
    %69 = math.tanh %49 : vector<2x2xf32>
    %70 = arith.negf %58 : vector<2x2xf32>
    %71 = math.exp %70 : vector<2x2xf32>
    %cst_11 = arith.constant 1.000000e+00 : f32
    %72 = vector.broadcast %cst_11 : f32 to vector<2x2xf32>
    %73 = arith.addf %72, %71 : vector<2x2xf32>
    %74 = arith.divf %72, %73 : vector<2x2xf32>
    %75 = arith.mulf %68, %20 : vector<2x2xf32>
    %76 = arith.mulf %63, %69 : vector<2x2xf32>
    %77 = arith.addf %75, %76 : vector<2x2xf32>
    %78 = math.tanh %77 : vector<2x2xf32>
    %79 = arith.mulf %74, %78 : vector<2x2xf32>
    %80 = vector.extract_strided_slice %79 {offsets = [0, 0], sizes = [2, 1], strides = [1, 1]} : vector<2x2xf32> to vector<2x1xf32>
    %81 = vector.extract_strided_slice %79 {offsets = [0, 1], sizes = [2, 1], strides = [1, 1]} : vector<2x2xf32> to vector<2x1xf32>
    %82 = vector.extract_strided_slice %6 {offsets = [2, 0], sizes = [2, 2], strides = [1, 1]} : vector<16x2xf32> to vector<2x2xf32>
    %83 = vector.broadcast %80 : vector<2x1xf32> to vector<2x2xf32>
    %84 = vector.broadcast %11 : vector<1x2xf32> to vector<2x2xf32>
    %85 = arith.mulf %83, %84 : vector<2x2xf32>
    %86 = vector.broadcast %81 : vector<2x1xf32> to vector<2x2xf32>
    %87 = vector.broadcast %15 : vector<1x2xf32> to vector<2x2xf32>
    %88 = arith.mulf %86, %87 : vector<2x2xf32>
    %89 = arith.addf %85, %88 : vector<2x2xf32>
    %90 = arith.addf %82, %89 : vector<2x2xf32>
    %91 = vector.extract_strided_slice %7 {offsets = [2, 0], sizes = [2, 2], strides = [1, 1]} : vector<16x2xf32> to vector<2x2xf32>
    %92 = vector.broadcast %80 : vector<2x1xf32> to vector<2x2xf32>
    %93 = vector.broadcast %12 : vector<1x2xf32> to vector<2x2xf32>
    %94 = arith.mulf %92, %93 : vector<2x2xf32>
    %95 = vector.broadcast %81 : vector<2x1xf32> to vector<2x2xf32>
    %96 = vector.broadcast %16 : vector<1x2xf32> to vector<2x2xf32>
    %97 = arith.mulf %95, %96 : vector<2x2xf32>
    %98 = arith.addf %94, %97 : vector<2x2xf32>
    %99 = arith.addf %91, %98 : vector<2x2xf32>
    %100 = vector.extract_strided_slice %8 {offsets = [2, 0], sizes = [2, 2], strides = [1, 1]} : vector<16x2xf32> to vector<2x2xf32>
    %101 = vector.broadcast %80 : vector<2x1xf32> to vector<2x2xf32>
    %102 = vector.broadcast %13 : vector<1x2xf32> to vector<2x2xf32>
    %103 = arith.mulf %101, %102 : vector<2x2xf32>
    %104 = vector.broadcast %81 : vector<2x1xf32> to vector<2x2xf32>
    %105 = vector.broadcast %17 : vector<1x2xf32> to vector<2x2xf32>
    %106 = arith.mulf %104, %105 : vector<2x2xf32>
    %107 = arith.addf %103, %106 : vector<2x2xf32>
    %108 = arith.addf %100, %107 : vector<2x2xf32>
    %109 = vector.extract_strided_slice %9 {offsets = [2, 0], sizes = [2, 2], strides = [1, 1]} : vector<16x2xf32> to vector<2x2xf32>
    %110 = vector.broadcast %80 : vector<2x1xf32> to vector<2x2xf32>
    %111 = vector.broadcast %14 : vector<1x2xf32> to vector<2x2xf32>
    %112 = arith.mulf %110, %111 : vector<2x2xf32>
    %113 = vector.broadcast %81 : vector<2x1xf32> to vector<2x2xf32>
    %114 = vector.broadcast %18 : vector<1x2xf32> to vector<2x2xf32>
    %115 = arith.mulf %113, %114 : vector<2x2xf32>
    %116 = arith.addf %112, %115 : vector<2x2xf32>
    %117 = arith.addf %109, %116 : vector<2x2xf32>
    %118 = arith.negf %90 : vector<2x2xf32>
    %119 = math.exp %118 : vector<2x2xf32>
    %cst_12 = arith.constant 1.000000e+00 : f32
    %120 = vector.broadcast %cst_12 : f32 to vector<2x2xf32>
    %121 = arith.addf %120, %119 : vector<2x2xf32>
    %122 = arith.divf %120, %121 : vector<2x2xf32>
    %123 = arith.negf %99 : vector<2x2xf32>
    %124 = math.exp %123 : vector<2x2xf32>
    %cst_13 = arith.constant 1.000000e+00 : f32
    %125 = vector.broadcast %cst_13 : f32 to vector<2x2xf32>
    %126 = arith.addf %125, %124 : vector<2x2xf32>
    %127 = arith.divf %125, %126 : vector<2x2xf32>
    %128 = math.tanh %108 : vector<2x2xf32>
    %129 = arith.negf %117 : vector<2x2xf32>
    %130 = math.exp %129 : vector<2x2xf32>
    %cst_14 = arith.constant 1.000000e+00 : f32
    %131 = vector.broadcast %cst_14 : f32 to vector<2x2xf32>
    %132 = arith.addf %131, %130 : vector<2x2xf32>
    %133 = arith.divf %131, %132 : vector<2x2xf32>
    %134 = arith.mulf %127, %77 : vector<2x2xf32>
    %135 = arith.mulf %122, %128 : vector<2x2xf32>
    %136 = arith.addf %134, %135 : vector<2x2xf32>
    %137 = math.tanh %136 : vector<2x2xf32>
    %138 = arith.mulf %133, %137 : vector<2x2xf32>
    %139 = vector.extract_strided_slice %138 {offsets = [0, 0], sizes = [2, 1], strides = [1, 1]} : vector<2x2xf32> to vector<2x1xf32>
    %140 = vector.extract_strided_slice %138 {offsets = [0, 1], sizes = [2, 1], strides = [1, 1]} : vector<2x2xf32> to vector<2x1xf32>
    %141 = vector.extract_strided_slice %6 {offsets = [4, 0], sizes = [2, 2], strides = [1, 1]} : vector<16x2xf32> to vector<2x2xf32>
    %142 = vector.broadcast %139 : vector<2x1xf32> to vector<2x2xf32>
    %143 = vector.broadcast %11 : vector<1x2xf32> to vector<2x2xf32>
    %144 = arith.mulf %142, %143 : vector<2x2xf32>
    %145 = vector.broadcast %140 : vector<2x1xf32> to vector<2x2xf32>
    %146 = vector.broadcast %15 : vector<1x2xf32> to vector<2x2xf32>
    %147 = arith.mulf %145, %146 : vector<2x2xf32>
    %148 = arith.addf %144, %147 : vector<2x2xf32>
    %149 = arith.addf %141, %148 : vector<2x2xf32>
    %150 = vector.extract_strided_slice %7 {offsets = [4, 0], sizes = [2, 2], strides = [1, 1]} : vector<16x2xf32> to vector<2x2xf32>
    %151 = vector.broadcast %139 : vector<2x1xf32> to vector<2x2xf32>
    %152 = vector.broadcast %12 : vector<1x2xf32> to vector<2x2xf32>
    %153 = arith.mulf %151, %152 : vector<2x2xf32>
    %154 = vector.broadcast %140 : vector<2x1xf32> to vector<2x2xf32>
    %155 = vector.broadcast %16 : vector<1x2xf32> to vector<2x2xf32>
    %156 = arith.mulf %154, %155 : vector<2x2xf32>
    %157 = arith.addf %153, %156 : vector<2x2xf32>
    %158 = arith.addf %150, %157 : vector<2x2xf32>
    %159 = vector.extract_strided_slice %8 {offsets = [4, 0], sizes = [2, 2], strides = [1, 1]} : vector<16x2xf32> to vector<2x2xf32>
    %160 = vector.broadcast %139 : vector<2x1xf32> to vector<2x2xf32>
    %161 = vector.broadcast %13 : vector<1x2xf32> to vector<2x2xf32>
    %162 = arith.mulf %160, %161 : vector<2x2xf32>
    %163 = vector.broadcast %140 : vector<2x1xf32> to vector<2x2xf32>
    %164 = vector.broadcast %17 : vector<1x2xf32> to vector<2x2xf32>
    %165 = arith.mulf %163, %164 : vector<2x2xf32>
    %166 = arith.addf %162, %165 : vector<2x2xf32>
    %167 = arith.addf %159, %166 : vector<2x2xf32>
    %168 = vector.extract_strided_slice %9 {offsets = [4, 0], sizes = [2, 2], strides = [1, 1]} : vector<16x2xf32> to vector<2x2xf32>
    %169 = vector.broadcast %139 : vector<2x1xf32> to vector<2x2xf32>
    %170 = vector.broadcast %14 : vector<1x2xf32> to vector<2x2xf32>
    %171 = arith.mulf %169, %170 : vector<2x2xf32>
    %172 = vector.broadcast %140 : vector<2x1xf32> to vector<2x2xf32>
    %173 = vector.broadcast %18 : vector<1x2xf32> to vector<2x2xf32>
    %174 = arith.mulf %172, %173 : vector<2x2xf32>
    %175 = arith.addf %171, %174 : vector<2x2xf32>
    %176 = arith.addf %168, %175 : vector<2x2xf32>
    %177 = arith.negf %149 : vector<2x2xf32>
    %178 = math.exp %177 : vector<2x2xf32>
    %cst_15 = arith.constant 1.000000e+00 : f32
    %179 = vector.broadcast %cst_15 : f32 to vector<2x2xf32>
    %180 = arith.addf %179, %178 : vector<2x2xf32>
    %181 = arith.divf %179, %180 : vector<2x2xf32>
    %182 = arith.negf %158 : vector<2x2xf32>
    %183 = math.exp %182 : vector<2x2xf32>
    %cst_16 = arith.constant 1.000000e+00 : f32
    %184 = vector.broadcast %cst_16 : f32 to vector<2x2xf32>
    %185 = arith.addf %184, %183 : vector<2x2xf32>
    %186 = arith.divf %184, %185 : vector<2x2xf32>
    %187 = math.tanh %167 : vector<2x2xf32>
    %188 = arith.negf %176 : vector<2x2xf32>
    %189 = math.exp %188 : vector<2x2xf32>
    %cst_17 = arith.constant 1.000000e+00 : f32
    %190 = vector.broadcast %cst_17 : f32 to vector<2x2xf32>
    %191 = arith.addf %190, %189 : vector<2x2xf32>
    %192 = arith.divf %190, %191 : vector<2x2xf32>
    %193 = arith.mulf %186, %136 : vector<2x2xf32>
    %194 = arith.mulf %181, %187 : vector<2x2xf32>
    %195 = arith.addf %193, %194 : vector<2x2xf32>
    %196 = math.tanh %195 : vector<2x2xf32>
    %197 = arith.mulf %192, %196 : vector<2x2xf32>
    %198 = vector.extract_strided_slice %197 {offsets = [0, 0], sizes = [2, 1], strides = [1, 1]} : vector<2x2xf32> to vector<2x1xf32>
    %199 = vector.extract_strided_slice %197 {offsets = [0, 1], sizes = [2, 1], strides = [1, 1]} : vector<2x2xf32> to vector<2x1xf32>
    %200 = vector.extract_strided_slice %6 {offsets = [6, 0], sizes = [2, 2], strides = [1, 1]} : vector<16x2xf32> to vector<2x2xf32>
    %201 = vector.broadcast %198 : vector<2x1xf32> to vector<2x2xf32>
    %202 = vector.broadcast %11 : vector<1x2xf32> to vector<2x2xf32>
    %203 = arith.mulf %201, %202 : vector<2x2xf32>
    %204 = vector.broadcast %199 : vector<2x1xf32> to vector<2x2xf32>
    %205 = vector.broadcast %15 : vector<1x2xf32> to vector<2x2xf32>
    %206 = arith.mulf %204, %205 : vector<2x2xf32>
    %207 = arith.addf %203, %206 : vector<2x2xf32>
    %208 = arith.addf %200, %207 : vector<2x2xf32>
    %209 = vector.extract_strided_slice %7 {offsets = [6, 0], sizes = [2, 2], strides = [1, 1]} : vector<16x2xf32> to vector<2x2xf32>
    %210 = vector.broadcast %198 : vector<2x1xf32> to vector<2x2xf32>
    %211 = vector.broadcast %12 : vector<1x2xf32> to vector<2x2xf32>
    %212 = arith.mulf %210, %211 : vector<2x2xf32>
    %213 = vector.broadcast %199 : vector<2x1xf32> to vector<2x2xf32>
    %214 = vector.broadcast %16 : vector<1x2xf32> to vector<2x2xf32>
    %215 = arith.mulf %213, %214 : vector<2x2xf32>
    %216 = arith.addf %212, %215 : vector<2x2xf32>
    %217 = arith.addf %209, %216 : vector<2x2xf32>
    %218 = vector.extract_strided_slice %8 {offsets = [6, 0], sizes = [2, 2], strides = [1, 1]} : vector<16x2xf32> to vector<2x2xf32>
    %219 = vector.broadcast %198 : vector<2x1xf32> to vector<2x2xf32>
    %220 = vector.broadcast %13 : vector<1x2xf32> to vector<2x2xf32>
    %221 = arith.mulf %219, %220 : vector<2x2xf32>
    %222 = vector.broadcast %199 : vector<2x1xf32> to vector<2x2xf32>
    %223 = vector.broadcast %17 : vector<1x2xf32> to vector<2x2xf32>
    %224 = arith.mulf %222, %223 : vector<2x2xf32>
    %225 = arith.addf %221, %224 : vector<2x2xf32>
    %226 = arith.addf %218, %225 : vector<2x2xf32>
    %227 = vector.extract_strided_slice %9 {offsets = [6, 0], sizes = [2, 2], strides = [1, 1]} : vector<16x2xf32> to vector<2x2xf32>
    %228 = vector.broadcast %198 : vector<2x1xf32> to vector<2x2xf32>
    %229 = vector.broadcast %14 : vector<1x2xf32> to vector<2x2xf32>
    %230 = arith.mulf %228, %229 : vector<2x2xf32>
    %231 = vector.broadcast %199 : vector<2x1xf32> to vector<2x2xf32>
    %232 = vector.broadcast %18 : vector<1x2xf32> to vector<2x2xf32>
    %233 = arith.mulf %231, %232 : vector<2x2xf32>
    %234 = arith.addf %230, %233 : vector<2x2xf32>
    %235 = arith.addf %227, %234 : vector<2x2xf32>
    %236 = arith.negf %208 : vector<2x2xf32>
    %237 = math.exp %236 : vector<2x2xf32>
    %cst_18 = arith.constant 1.000000e+00 : f32
    %238 = vector.broadcast %cst_18 : f32 to vector<2x2xf32>
    %239 = arith.addf %238, %237 : vector<2x2xf32>
    %240 = arith.divf %238, %239 : vector<2x2xf32>
    %241 = arith.negf %217 : vector<2x2xf32>
    %242 = math.exp %241 : vector<2x2xf32>
    %cst_19 = arith.constant 1.000000e+00 : f32
    %243 = vector.broadcast %cst_19 : f32 to vector<2x2xf32>
    %244 = arith.addf %243, %242 : vector<2x2xf32>
    %245 = arith.divf %243, %244 : vector<2x2xf32>
    %246 = math.tanh %226 : vector<2x2xf32>
    %247 = arith.negf %235 : vector<2x2xf32>
    %248 = math.exp %247 : vector<2x2xf32>
    %cst_20 = arith.constant 1.000000e+00 : f32
    %249 = vector.broadcast %cst_20 : f32 to vector<2x2xf32>
    %250 = arith.addf %249, %248 : vector<2x2xf32>
    %251 = arith.divf %249, %250 : vector<2x2xf32>
    %252 = arith.mulf %245, %195 : vector<2x2xf32>
    %253 = arith.mulf %240, %246 : vector<2x2xf32>
    %254 = arith.addf %252, %253 : vector<2x2xf32>
    %255 = math.tanh %254 : vector<2x2xf32>
    %256 = arith.mulf %251, %255 : vector<2x2xf32>
    %257 = vector.extract_strided_slice %256 {offsets = [0, 0], sizes = [2, 1], strides = [1, 1]} : vector<2x2xf32> to vector<2x1xf32>
    %258 = vector.extract_strided_slice %256 {offsets = [0, 1], sizes = [2, 1], strides = [1, 1]} : vector<2x2xf32> to vector<2x1xf32>
    %259 = vector.extract_strided_slice %6 {offsets = [8, 0], sizes = [2, 2], strides = [1, 1]} : vector<16x2xf32> to vector<2x2xf32>
    %260 = vector.broadcast %257 : vector<2x1xf32> to vector<2x2xf32>
    %261 = vector.broadcast %11 : vector<1x2xf32> to vector<2x2xf32>
    %262 = arith.mulf %260, %261 : vector<2x2xf32>
    %263 = vector.broadcast %258 : vector<2x1xf32> to vector<2x2xf32>
    %264 = vector.broadcast %15 : vector<1x2xf32> to vector<2x2xf32>
    %265 = arith.mulf %263, %264 : vector<2x2xf32>
    %266 = arith.addf %262, %265 : vector<2x2xf32>
    %267 = arith.addf %259, %266 : vector<2x2xf32>
    %268 = vector.extract_strided_slice %7 {offsets = [8, 0], sizes = [2, 2], strides = [1, 1]} : vector<16x2xf32> to vector<2x2xf32>
    %269 = vector.broadcast %257 : vector<2x1xf32> to vector<2x2xf32>
    %270 = vector.broadcast %12 : vector<1x2xf32> to vector<2x2xf32>
    %271 = arith.mulf %269, %270 : vector<2x2xf32>
    %272 = vector.broadcast %258 : vector<2x1xf32> to vector<2x2xf32>
    %273 = vector.broadcast %16 : vector<1x2xf32> to vector<2x2xf32>
    %274 = arith.mulf %272, %273 : vector<2x2xf32>
    %275 = arith.addf %271, %274 : vector<2x2xf32>
    %276 = arith.addf %268, %275 : vector<2x2xf32>
    %277 = vector.extract_strided_slice %8 {offsets = [8, 0], sizes = [2, 2], strides = [1, 1]} : vector<16x2xf32> to vector<2x2xf32>
    %278 = vector.broadcast %257 : vector<2x1xf32> to vector<2x2xf32>
    %279 = vector.broadcast %13 : vector<1x2xf32> to vector<2x2xf32>
    %280 = arith.mulf %278, %279 : vector<2x2xf32>
    %281 = vector.broadcast %258 : vector<2x1xf32> to vector<2x2xf32>
    %282 = vector.broadcast %17 : vector<1x2xf32> to vector<2x2xf32>
    %283 = arith.mulf %281, %282 : vector<2x2xf32>
    %284 = arith.addf %280, %283 : vector<2x2xf32>
    %285 = arith.addf %277, %284 : vector<2x2xf32>
    %286 = vector.extract_strided_slice %9 {offsets = [8, 0], sizes = [2, 2], strides = [1, 1]} : vector<16x2xf32> to vector<2x2xf32>
    %287 = vector.broadcast %257 : vector<2x1xf32> to vector<2x2xf32>
    %288 = vector.broadcast %14 : vector<1x2xf32> to vector<2x2xf32>
    %289 = arith.mulf %287, %288 : vector<2x2xf32>
    %290 = vector.broadcast %258 : vector<2x1xf32> to vector<2x2xf32>
    %291 = vector.broadcast %18 : vector<1x2xf32> to vector<2x2xf32>
    %292 = arith.mulf %290, %291 : vector<2x2xf32>
    %293 = arith.addf %289, %292 : vector<2x2xf32>
    %294 = arith.addf %286, %293 : vector<2x2xf32>
    %295 = arith.negf %267 : vector<2x2xf32>
    %296 = math.exp %295 : vector<2x2xf32>
    %cst_21 = arith.constant 1.000000e+00 : f32
    %297 = vector.broadcast %cst_21 : f32 to vector<2x2xf32>
    %298 = arith.addf %297, %296 : vector<2x2xf32>
    %299 = arith.divf %297, %298 : vector<2x2xf32>
    %300 = arith.negf %276 : vector<2x2xf32>
    %301 = math.exp %300 : vector<2x2xf32>
    %cst_22 = arith.constant 1.000000e+00 : f32
    %302 = vector.broadcast %cst_22 : f32 to vector<2x2xf32>
    %303 = arith.addf %302, %301 : vector<2x2xf32>
    %304 = arith.divf %302, %303 : vector<2x2xf32>
    %305 = math.tanh %285 : vector<2x2xf32>
    %306 = arith.negf %294 : vector<2x2xf32>
    %307 = math.exp %306 : vector<2x2xf32>
    %cst_23 = arith.constant 1.000000e+00 : f32
    %308 = vector.broadcast %cst_23 : f32 to vector<2x2xf32>
    %309 = arith.addf %308, %307 : vector<2x2xf32>
    %310 = arith.divf %308, %309 : vector<2x2xf32>
    %311 = arith.mulf %304, %254 : vector<2x2xf32>
    %312 = arith.mulf %299, %305 : vector<2x2xf32>
    %313 = arith.addf %311, %312 : vector<2x2xf32>
    %314 = math.tanh %313 : vector<2x2xf32>
    %315 = arith.mulf %310, %314 : vector<2x2xf32>
    %316 = vector.extract_strided_slice %315 {offsets = [0, 0], sizes = [2, 1], strides = [1, 1]} : vector<2x2xf32> to vector<2x1xf32>
    %317 = vector.extract_strided_slice %315 {offsets = [0, 1], sizes = [2, 1], strides = [1, 1]} : vector<2x2xf32> to vector<2x1xf32>
    %318 = vector.extract_strided_slice %6 {offsets = [10, 0], sizes = [2, 2], strides = [1, 1]} : vector<16x2xf32> to vector<2x2xf32>
    %319 = vector.broadcast %316 : vector<2x1xf32> to vector<2x2xf32>
    %320 = vector.broadcast %11 : vector<1x2xf32> to vector<2x2xf32>
    %321 = arith.mulf %319, %320 : vector<2x2xf32>
    %322 = vector.broadcast %317 : vector<2x1xf32> to vector<2x2xf32>
    %323 = vector.broadcast %15 : vector<1x2xf32> to vector<2x2xf32>
    %324 = arith.mulf %322, %323 : vector<2x2xf32>
    %325 = arith.addf %321, %324 : vector<2x2xf32>
    %326 = arith.addf %318, %325 : vector<2x2xf32>
    %327 = vector.extract_strided_slice %7 {offsets = [10, 0], sizes = [2, 2], strides = [1, 1]} : vector<16x2xf32> to vector<2x2xf32>
    %328 = vector.broadcast %316 : vector<2x1xf32> to vector<2x2xf32>
    %329 = vector.broadcast %12 : vector<1x2xf32> to vector<2x2xf32>
    %330 = arith.mulf %328, %329 : vector<2x2xf32>
    %331 = vector.broadcast %317 : vector<2x1xf32> to vector<2x2xf32>
    %332 = vector.broadcast %16 : vector<1x2xf32> to vector<2x2xf32>
    %333 = arith.mulf %331, %332 : vector<2x2xf32>
    %334 = arith.addf %330, %333 : vector<2x2xf32>
    %335 = arith.addf %327, %334 : vector<2x2xf32>
    %336 = vector.extract_strided_slice %8 {offsets = [10, 0], sizes = [2, 2], strides = [1, 1]} : vector<16x2xf32> to vector<2x2xf32>
    %337 = vector.broadcast %316 : vector<2x1xf32> to vector<2x2xf32>
    %338 = vector.broadcast %13 : vector<1x2xf32> to vector<2x2xf32>
    %339 = arith.mulf %337, %338 : vector<2x2xf32>
    %340 = vector.broadcast %317 : vector<2x1xf32> to vector<2x2xf32>
    %341 = vector.broadcast %17 : vector<1x2xf32> to vector<2x2xf32>
    %342 = arith.mulf %340, %341 : vector<2x2xf32>
    %343 = arith.addf %339, %342 : vector<2x2xf32>
    %344 = arith.addf %336, %343 : vector<2x2xf32>
    %345 = vector.extract_strided_slice %9 {offsets = [10, 0], sizes = [2, 2], strides = [1, 1]} : vector<16x2xf32> to vector<2x2xf32>
    %346 = vector.broadcast %316 : vector<2x1xf32> to vector<2x2xf32>
    %347 = vector.broadcast %14 : vector<1x2xf32> to vector<2x2xf32>
    %348 = arith.mulf %346, %347 : vector<2x2xf32>
    %349 = vector.broadcast %317 : vector<2x1xf32> to vector<2x2xf32>
    %350 = vector.broadcast %18 : vector<1x2xf32> to vector<2x2xf32>
    %351 = arith.mulf %349, %350 : vector<2x2xf32>
    %352 = arith.addf %348, %351 : vector<2x2xf32>
    %353 = arith.addf %345, %352 : vector<2x2xf32>
    %354 = arith.negf %326 : vector<2x2xf32>
    %355 = math.exp %354 : vector<2x2xf32>
    %cst_24 = arith.constant 1.000000e+00 : f32
    %356 = vector.broadcast %cst_24 : f32 to vector<2x2xf32>
    %357 = arith.addf %356, %355 : vector<2x2xf32>
    %358 = arith.divf %356, %357 : vector<2x2xf32>
    %359 = arith.negf %335 : vector<2x2xf32>
    %360 = math.exp %359 : vector<2x2xf32>
    %cst_25 = arith.constant 1.000000e+00 : f32
    %361 = vector.broadcast %cst_25 : f32 to vector<2x2xf32>
    %362 = arith.addf %361, %360 : vector<2x2xf32>
    %363 = arith.divf %361, %362 : vector<2x2xf32>
    %364 = math.tanh %344 : vector<2x2xf32>
    %365 = arith.negf %353 : vector<2x2xf32>
    %366 = math.exp %365 : vector<2x2xf32>
    %cst_26 = arith.constant 1.000000e+00 : f32
    %367 = vector.broadcast %cst_26 : f32 to vector<2x2xf32>
    %368 = arith.addf %367, %366 : vector<2x2xf32>
    %369 = arith.divf %367, %368 : vector<2x2xf32>
    %370 = arith.mulf %363, %313 : vector<2x2xf32>
    %371 = arith.mulf %358, %364 : vector<2x2xf32>
    %372 = arith.addf %370, %371 : vector<2x2xf32>
    %373 = math.tanh %372 : vector<2x2xf32>
    %374 = arith.mulf %369, %373 : vector<2x2xf32>
    %375 = vector.extract_strided_slice %374 {offsets = [0, 0], sizes = [2, 1], strides = [1, 1]} : vector<2x2xf32> to vector<2x1xf32>
    %376 = vector.extract_strided_slice %374 {offsets = [0, 1], sizes = [2, 1], strides = [1, 1]} : vector<2x2xf32> to vector<2x1xf32>
    %377 = vector.extract_strided_slice %6 {offsets = [12, 0], sizes = [2, 2], strides = [1, 1]} : vector<16x2xf32> to vector<2x2xf32>
    %378 = vector.broadcast %375 : vector<2x1xf32> to vector<2x2xf32>
    %379 = vector.broadcast %11 : vector<1x2xf32> to vector<2x2xf32>
    %380 = arith.mulf %378, %379 : vector<2x2xf32>
    %381 = vector.broadcast %376 : vector<2x1xf32> to vector<2x2xf32>
    %382 = vector.broadcast %15 : vector<1x2xf32> to vector<2x2xf32>
    %383 = arith.mulf %381, %382 : vector<2x2xf32>
    %384 = arith.addf %380, %383 : vector<2x2xf32>
    %385 = arith.addf %377, %384 : vector<2x2xf32>
    %386 = vector.extract_strided_slice %7 {offsets = [12, 0], sizes = [2, 2], strides = [1, 1]} : vector<16x2xf32> to vector<2x2xf32>
    %387 = vector.broadcast %375 : vector<2x1xf32> to vector<2x2xf32>
    %388 = vector.broadcast %12 : vector<1x2xf32> to vector<2x2xf32>
    %389 = arith.mulf %387, %388 : vector<2x2xf32>
    %390 = vector.broadcast %376 : vector<2x1xf32> to vector<2x2xf32>
    %391 = vector.broadcast %16 : vector<1x2xf32> to vector<2x2xf32>
    %392 = arith.mulf %390, %391 : vector<2x2xf32>
    %393 = arith.addf %389, %392 : vector<2x2xf32>
    %394 = arith.addf %386, %393 : vector<2x2xf32>
    %395 = vector.extract_strided_slice %8 {offsets = [12, 0], sizes = [2, 2], strides = [1, 1]} : vector<16x2xf32> to vector<2x2xf32>
    %396 = vector.broadcast %375 : vector<2x1xf32> to vector<2x2xf32>
    %397 = vector.broadcast %13 : vector<1x2xf32> to vector<2x2xf32>
    %398 = arith.mulf %396, %397 : vector<2x2xf32>
    %399 = vector.broadcast %376 : vector<2x1xf32> to vector<2x2xf32>
    %400 = vector.broadcast %17 : vector<1x2xf32> to vector<2x2xf32>
    %401 = arith.mulf %399, %400 : vector<2x2xf32>
    %402 = arith.addf %398, %401 : vector<2x2xf32>
    %403 = arith.addf %395, %402 : vector<2x2xf32>
    %404 = vector.extract_strided_slice %9 {offsets = [12, 0], sizes = [2, 2], strides = [1, 1]} : vector<16x2xf32> to vector<2x2xf32>
    %405 = vector.broadcast %375 : vector<2x1xf32> to vector<2x2xf32>
    %406 = vector.broadcast %14 : vector<1x2xf32> to vector<2x2xf32>
    %407 = arith.mulf %405, %406 : vector<2x2xf32>
    %408 = vector.broadcast %376 : vector<2x1xf32> to vector<2x2xf32>
    %409 = vector.broadcast %18 : vector<1x2xf32> to vector<2x2xf32>
    %410 = arith.mulf %408, %409 : vector<2x2xf32>
    %411 = arith.addf %407, %410 : vector<2x2xf32>
    %412 = arith.addf %404, %411 : vector<2x2xf32>
    %413 = arith.negf %385 : vector<2x2xf32>
    %414 = math.exp %413 : vector<2x2xf32>
    %cst_27 = arith.constant 1.000000e+00 : f32
    %415 = vector.broadcast %cst_27 : f32 to vector<2x2xf32>
    %416 = arith.addf %415, %414 : vector<2x2xf32>
    %417 = arith.divf %415, %416 : vector<2x2xf32>
    %418 = arith.negf %394 : vector<2x2xf32>
    %419 = math.exp %418 : vector<2x2xf32>
    %cst_28 = arith.constant 1.000000e+00 : f32
    %420 = vector.broadcast %cst_28 : f32 to vector<2x2xf32>
    %421 = arith.addf %420, %419 : vector<2x2xf32>
    %422 = arith.divf %420, %421 : vector<2x2xf32>
    %423 = math.tanh %403 : vector<2x2xf32>
    %424 = arith.negf %412 : vector<2x2xf32>
    %425 = math.exp %424 : vector<2x2xf32>
    %cst_29 = arith.constant 1.000000e+00 : f32
    %426 = vector.broadcast %cst_29 : f32 to vector<2x2xf32>
    %427 = arith.addf %426, %425 : vector<2x2xf32>
    %428 = arith.divf %426, %427 : vector<2x2xf32>
    %429 = arith.mulf %422, %372 : vector<2x2xf32>
    %430 = arith.mulf %417, %423 : vector<2x2xf32>
    %431 = arith.addf %429, %430 : vector<2x2xf32>
    %432 = math.tanh %431 : vector<2x2xf32>
    %433 = arith.mulf %428, %432 : vector<2x2xf32>
    %434 = vector.extract_strided_slice %433 {offsets = [0, 0], sizes = [2, 1], strides = [1, 1]} : vector<2x2xf32> to vector<2x1xf32>
    %435 = vector.extract_strided_slice %433 {offsets = [0, 1], sizes = [2, 1], strides = [1, 1]} : vector<2x2xf32> to vector<2x1xf32>
    %436 = vector.extract_strided_slice %6 {offsets = [14, 0], sizes = [2, 2], strides = [1, 1]} : vector<16x2xf32> to vector<2x2xf32>
    %437 = vector.broadcast %434 : vector<2x1xf32> to vector<2x2xf32>
    %438 = vector.broadcast %11 : vector<1x2xf32> to vector<2x2xf32>
    %439 = arith.mulf %437, %438 : vector<2x2xf32>
    %440 = vector.broadcast %435 : vector<2x1xf32> to vector<2x2xf32>
    %441 = vector.broadcast %15 : vector<1x2xf32> to vector<2x2xf32>
    %442 = arith.mulf %440, %441 : vector<2x2xf32>
    %443 = arith.addf %439, %442 : vector<2x2xf32>
    %444 = arith.addf %436, %443 : vector<2x2xf32>
    %445 = vector.extract_strided_slice %7 {offsets = [14, 0], sizes = [2, 2], strides = [1, 1]} : vector<16x2xf32> to vector<2x2xf32>
    %446 = vector.broadcast %434 : vector<2x1xf32> to vector<2x2xf32>
    %447 = vector.broadcast %12 : vector<1x2xf32> to vector<2x2xf32>
    %448 = arith.mulf %446, %447 : vector<2x2xf32>
    %449 = vector.broadcast %435 : vector<2x1xf32> to vector<2x2xf32>
    %450 = vector.broadcast %16 : vector<1x2xf32> to vector<2x2xf32>
    %451 = arith.mulf %449, %450 : vector<2x2xf32>
    %452 = arith.addf %448, %451 : vector<2x2xf32>
    %453 = arith.addf %445, %452 : vector<2x2xf32>
    %454 = vector.extract_strided_slice %8 {offsets = [14, 0], sizes = [2, 2], strides = [1, 1]} : vector<16x2xf32> to vector<2x2xf32>
    %455 = vector.broadcast %434 : vector<2x1xf32> to vector<2x2xf32>
    %456 = vector.broadcast %13 : vector<1x2xf32> to vector<2x2xf32>
    %457 = arith.mulf %455, %456 : vector<2x2xf32>
    %458 = vector.broadcast %435 : vector<2x1xf32> to vector<2x2xf32>
    %459 = vector.broadcast %17 : vector<1x2xf32> to vector<2x2xf32>
    %460 = arith.mulf %458, %459 : vector<2x2xf32>
    %461 = arith.addf %457, %460 : vector<2x2xf32>
    %462 = arith.addf %454, %461 : vector<2x2xf32>
    %463 = vector.extract_strided_slice %9 {offsets = [14, 0], sizes = [2, 2], strides = [1, 1]} : vector<16x2xf32> to vector<2x2xf32>
    %464 = vector.broadcast %434 : vector<2x1xf32> to vector<2x2xf32>
    %465 = vector.broadcast %14 : vector<1x2xf32> to vector<2x2xf32>
    %466 = arith.mulf %464, %465 : vector<2x2xf32>
    %467 = vector.broadcast %435 : vector<2x1xf32> to vector<2x2xf32>
    %468 = vector.broadcast %18 : vector<1x2xf32> to vector<2x2xf32>
    %469 = arith.mulf %467, %468 : vector<2x2xf32>
    %470 = arith.addf %466, %469 : vector<2x2xf32>
    %471 = arith.addf %463, %470 : vector<2x2xf32>
    %472 = arith.negf %444 : vector<2x2xf32>
    %473 = math.exp %472 : vector<2x2xf32>
    %cst_30 = arith.constant 1.000000e+00 : f32
    %474 = vector.broadcast %cst_30 : f32 to vector<2x2xf32>
    %475 = arith.addf %474, %473 : vector<2x2xf32>
    %476 = arith.divf %474, %475 : vector<2x2xf32>
    %477 = arith.negf %453 : vector<2x2xf32>
    %478 = math.exp %477 : vector<2x2xf32>
    %cst_31 = arith.constant 1.000000e+00 : f32
    %479 = vector.broadcast %cst_31 : f32 to vector<2x2xf32>
    %480 = arith.addf %479, %478 : vector<2x2xf32>
    %481 = arith.divf %479, %480 : vector<2x2xf32>
    %482 = math.tanh %462 : vector<2x2xf32>
    %483 = arith.negf %471 : vector<2x2xf32>
    %484 = math.exp %483 : vector<2x2xf32>
    %cst_32 = arith.constant 1.000000e+00 : f32
    %485 = vector.broadcast %cst_32 : f32 to vector<2x2xf32>
    %486 = arith.addf %485, %484 : vector<2x2xf32>
    %487 = arith.divf %485, %486 : vector<2x2xf32>
    %488 = arith.mulf %481, %431 : vector<2x2xf32>
    %489 = arith.mulf %476, %482 : vector<2x2xf32>
    %490 = arith.addf %488, %489 : vector<2x2xf32>
    %491 = math.tanh %490 : vector<2x2xf32>
    %492 = arith.mulf %487, %491 : vector<2x2xf32>
    %cst_33 = arith.constant 0.000000e+00 : f32
    %493 = vector.broadcast %cst_33 : f32 to vector<2x2xf32>
    %494 = arith.maximumf %492, %493 : vector<2x2xf32>
    %c0_34 = arith.constant 0 : index
    %c0_35 = arith.constant 0 : index
    %495 = vector.load %arg4[%c0_34, %c0_35] : memref<2x128xf32, #tpu.memory_space<vmem>>, vector<2x128xf32>
    %cst_36 = arith.constant dense<0.000000e+00> : vector<2x128xf32>
    %496 = tpu.matmul %494, %495, %cst_36 {dimension_numbers = #tpu.dot_dimension_numbers<[1], [0], [0], [1], [0, 0, 1, 1], [], []>} : vector<2x2xf32>, vector<2x128xf32>, vector<2x128xf32> -> vector<2x128xf32>
    %c0_37 = arith.constant 0 : index
    %c0_38 = arith.constant 0 : index
    %497 = vector.load %arg5[%c0_37, %c0_38] : memref<1x128xf32, #tpu.memory_space<vmem>>, vector<1x128xf32>
    %498 = vector.broadcast %497 : vector<1x128xf32> to vector<2x128xf32>
    %499 = arith.addf %496, %498 : vector<2x128xf32>
    %cst_39 = arith.constant 0.000000e+00 : f32
    %500 = vector.broadcast %cst_39 : f32 to vector<2x128xf32>
    %501 = arith.maximumf %499, %500 : vector<2x128xf32>
    %c0_40 = arith.constant 0 : index
    %c0_41 = arith.constant 0 : index
    %502 = vector.load %arg6[%c0_40, %c0_41] : memref<1x128xf32, #tpu.memory_space<vmem>>, vector<1x128xf32>
    %503 = vector.broadcast %502 : vector<1x128xf32> to vector<2x128xf32>
    %504 = arith.mulf %501, %503 : vector<2x128xf32>
    %cst_42 = arith.constant dense<0.000000e+00> : vector<2xf32>
    %505 = vector.multi_reduction <add>, %504, %cst_42 [1] : vector<2x128xf32> to vector<2xf32>
    %506 = vector.shape_cast %505 : vector<2xf32> to vector<2x1xf32>
    %c0_43 = arith.constant 0 : index
    %c0_44 = arith.constant 0 : index
    %507 = vector.load %arg7[%c0_43, %c0_44] : memref<1x1xf32, #tpu.memory_space<vmem>>, vector<1x1xf32>
    %508 = vector.broadcast %507 : vector<1x1xf32> to vector<2x1xf32>
    %509 = arith.addf %506, %508 : vector<2x1xf32>
    %c0_45 = arith.constant 0 : index
    %c0_46 = arith.constant 0 : index
    %510 = vector.load %arg8[%c0_45, %c0_46] : memref<2x1xf32, #tpu.memory_space<vmem>>, vector<2x1xf32>
    tpu.vector_store %arg8[%c0_45, %c0_46], %509 {strides = array<i32>} : memref<2x1xf32, #tpu.memory_space<vmem>>, vector<2x1xf32>,
    return
  }
}

</mosaic_0001>

<llo_original>
// kernel: tpu_custom_call.1
$region0: #{tpu_custom_call.1}
  #allocation0 [shape = 'u32[]', space=smem, size = 0x4, offset = 0x4, fixed_abs, tag = 'smem constant byte address 0x4 - core index']
  #allocation1 [shape = 'u32[144,128]{1,0:T(1,128)}', space=vmem, size = 0x12000, scoped, tag = 'internal scratch']
  #allocation2 [shape = 'f32[1,1]{1,0:T(1,128)S(1)}', space=vmem, size = 0x200, scoped, tag = 'scoped memory for tpu_custom_call.1']
  %s0 = inlined_call_operand.vmem [shape: f32[16,4], index: 0, kind: input, shape index: {}]
  %s1 = inlined_call_operand.vmem [shape: f32[4,8], index: 1, kind: input, shape index: {}]
  %s2 = inlined_call_operand.vmem [shape: f32[2,8], index: 2, kind: input, shape index: {}]
  %s3 = inlined_call_operand.vmem [shape: f32[1,8], index: 3, kind: input, shape index: {}]
  %s4 = inlined_call_operand.vmem [shape: f32[2,128], index: 4, kind: input, shape index: {}]
  %s5 = inlined_call_operand.vmem [shape: f32[1,128], index: 5, kind: input, shape index: {}]
  %s6 = inlined_call_operand.vmem [shape: f32[1,128], index: 6, kind: input, shape index: {}]
  %s7 = inlined_call_operand.<no memory space> [shape: f32[1,1], index: 7, kind: input, shape index: {}]
  %s8 = inlined_call_operand.vmem [shape: f32[2,1], index: 8, kind: output, shape index: {}]
  %s9 = sld [smem:[#allocation0]]
  $region42: #{tpu_custom_call.1} parent=0
    _
  %s11 = ssub.s32 1, %s9
  %s12 = scalar_select 0, %s11, %s9
  %v13 = vstv %s7
  %14 = vst [vmem:[#allocation2] sm:$0x1] %v13
  // Predicated region
  $region2: #{tpu_custom_call.1} parent=0 // pred_check
    _
  $region3: #{tpu_custom_call.1} parent=0 // pred_check_branch
    %16 = sbr.rel (0) target = $region5
  $region4: #{tpu_custom_call.1} parent=0 // pred_region
    _
  $region5: #{tpu_custom_call.1} parent=0 // pred_fallthru
    _
  // Predicated region
  $region6: #{tpu_custom_call.1} parent=0 // pred_check
    _
  $region7: #{tpu_custom_call.1} parent=0 // pred_check_branch
    %18 = sbr.rel (0) target = $region9
  $region8: #{tpu_custom_call.1} parent=0 // pred_region
    _
  $region9: #{tpu_custom_call.1} parent=0 // pred_fallthru
    _
  // Predicated region
  $region10: #{tpu_custom_call.1} parent=0 // pred_check
    _
  $region11: #{tpu_custom_call.1} parent=0 // pred_check_branch
    %20 = sbr.rel (0) target = $region13
  $region12: #{tpu_custom_call.1} parent=0 // pred_region
    _
  $region13: #{tpu_custom_call.1} parent=0 // pred_fallthru
    _
  // Predicated region
  $region14: #{tpu_custom_call.1} parent=0 // pred_check
    _
  $region15: #{tpu_custom_call.1} parent=0 // pred_check_branch
    %22 = sbr.rel (0) target = $region17
  $region16: #{tpu_custom_call.1} parent=0 // pred_region
    _
  $region17: #{tpu_custom_call.1} parent=0 // pred_fallthru
    _
  // Predicated region
  $region18: #{tpu_custom_call.1} parent=0 // pred_check
    _
  $region19: #{tpu_custom_call.1} parent=0 // pred_check_branch
    %24 = sbr.rel (0) target = $region21
  $region20: #{tpu_custom_call.1} parent=0 // pred_region
    _
  $region21: #{tpu_custom_call.1} parent=0 // pred_fallthru
    _
  // Predicated region
  $region22: #{tpu_custom_call.1} parent=0 // pred_check
    _
  $region23: #{tpu_custom_call.1} parent=0 // pred_check_branch
    %26 = sbr.rel (0) target = $region25
  $region24: #{tpu_custom_call.1} parent=0 // pred_region
    _
  $region25: #{tpu_custom_call.1} parent=0 // pred_fallthru
    _
  // Predicated region
  $region26: #{tpu_custom_call.1} parent=0 // pred_check
    _
  $region27: #{tpu_custom_call.1} parent=0 // pred_check_branch
    %28 = sbr.rel (0) target = $region29
  $region28: #{tpu_custom_call.1} parent=0 // pred_region
    _
  $region29: #{tpu_custom_call.1} parent=0 // pred_fallthru
    _
  // Predicated region
  $region30: #{tpu_custom_call.1} parent=0 // pred_check
    _
  $region31: #{tpu_custom_call.1} parent=0 // pred_check_branch
    %30 = sbr.rel (0) target = $region33
  $region32: #{tpu_custom_call.1} parent=0 // pred_region
    _
  $region33: #{tpu_custom_call.1} parent=0 // pred_fallthru
    _
  %v31 = vld [vmem:[%s0] sm:$0xff]
  %v32 = vld [vmem:[%s0 + $0x8] sm:$0xff]
  %v33 = vld [vmem:[%s1] sm:$0xf]
  %v34 = vld [vmem:[%s3] sm:$0x1]
  %v36 = vlaneseq
  %v37 = vshrl.u32 %v36, 7
  %v38 = vsub.s32 0, %v37
  %v39 = vrot.slane %v34, %v38
  %vm41 = vcmask 31744
  %v43 = vsel %vm41, %v31, 0
  %v46 = vsel %vm41, %v32, 0
  %vm48 = vcmask 1043456
  %v50 = vsel %vm48, %v33, 0
  %52 = vmatprep.subr.mxu0 0.0
  %53 = vmatpush1.msra.mxu0 0.0
  %54 = vmatprep.subr.mxu0 0.0
  %55 = vmatpush1.msra.mxu0 0.0
  %56 = vmatprep.subr.mxu0 0.0
  %57 = vmatpush1.msra.mxu0 0.0
  %58 = vmatprep.subr.mxu0 0.0
  %59 = vmatpush1.msra.mxu0 0.0
  %60 = vmatprep.subr.mxu0 0.0
  %61 = vmatpush1.msra.mxu0 0.0
  %62 = vmatprep.subr.mxu0 0.0
  %63 = vmatpush1.msra.mxu0 0.0
  %64 = vmatprep.subr.mxu0 0.0
  %65 = vmatpush1.msra.mxu0 0.0
  %66 = vmatprep.subr.mxu0 0.0
  %67 = vmatpush1.msra.mxu0 0.0
  %68 = vmatprep.subr.mxu0 0.0
  %69 = vmatpush1.msra.mxu0 0.0
  %70 = vmatprep.subr.mxu0 0.0
  %71 = vmatpush1.msra.mxu0 0.0
  %72 = vmatprep.subr.mxu0 0.0
  %73 = vmatpush1.msra.mxu0 0.0
  %74 = vmatprep.subr.mxu0 0.0
  %75 = vmatpush1.msra.mxu0 0.0
  %76 = vmatprep.subr.mxu0 0.0
  %77 = vmatpush1.msra.mxu0 0.0
  %78 = vmatprep.subr.mxu0 0.0
  %79 = vmatpush1.msra.mxu0 0.0
  %80 = vmatprep.subr.mxu0 0.0
  %81 = vmatpush1.msra.mxu0 0.0
  %82 = vmatprep.subr.mxu0 0.0
  %83 = vmatpush1.msra.mxu0 %v50
  %84 = vmatprep.subr.mxu0 0.0
  %85 = vmatpush2.msra.mxu0 0.0
  %86 = vmatprep.subr.mxu0 0.0
  %87 = vmatpush2.msra.mxu0 0.0
  %88 = vmatprep.subr.mxu0 0.0
  %89 = vmatpush2.msra.mxu0 0.0
  %90 = vmatprep.subr.mxu0 0.0
  %91 = vmatpush2.msra.mxu0 0.0
  %92 = vmatprep.subr.mxu0 0.0
  %93 = vmatpush2.msra.mxu0 0.0
  %94 = vmatprep.subr.mxu0 0.0
  %95 = vmatpush2.msra.mxu0 0.0
  %96 = vmatprep.subr.mxu0 0.0
  %97 = vmatpush2.msra.mxu0 0.0
  %98 = vmatprep.subr.mxu0 0.0
  %99 = vmatpush2.msra.mxu0 0.0
  %100 = vmatprep.subr.mxu0 0.0
  %101 = vmatpush2.msra.mxu0 0.0
  %102 = vmatprep.subr.mxu0 0.0
  %103 = vmatpush2.msra.mxu0 0.0
  %104 = vmatprep.subr.mxu0 0.0
  %105 = vmatpush2.msra.mxu0 0.0
  %106 = vmatprep.subr.mxu0 0.0
  %107 = vmatpush2.msra.mxu0 0.0
  %108 = vmatprep.subr.mxu0 0.0
  %109 = vmatpush2.msra.mxu0 0.0
  %110 = vmatprep.subr.mxu0 0.0
  %111 = vmatpush2.msra.mxu0 0.0
  %112 = vmatprep.subr.mxu0 0.0
  %113 = vmatpush2.msra.mxu0 0.0
  %114 = vmatprep.subr.mxu0 0.0
  %115 = vmatpush2.msra.mxu0 0.0
  %116 = vmatprep.mubr.f32.mxu0 0.0
  %117 = vmatmul.mubr.f32.gmra.mxu0 %v43
  %v118 = vpop.f32.mrf.mxu0
  %v119 = vadd.f32 %v39, %v118
  %v120 = vpop.f32.mrf.mxu0
  %121 = vmatprep.mubr.f32.mxu0 0.0
  %122 = vmatmul.mubr.f32.gmra.mxu0 %v46
  %v123 = vpop.f32.mrf.mxu0
  %v124 = vadd.f32 %v39, %v123
  %v125 = vpop.f32.mrf.mxu0
  %126 = vdwg.mxu0
  %v127 = vld [vmem:[%s2] sm:$0x3]
  %v128 = vlaneseq
  %v129 = vshrl.u32 %v128, 7
  %v130 = vsub.s32 0, %v129
  %v131 = vrot.slane %v127, %v130
  %v132 = vmul.f32 %v131, 0.0
  %v133 = vlaneseq
  %v134 = vshrl.u32 %v133, 7
  %v135 = vsub.s32 1, %v134
  %v136 = vrot.slane %v127, %v135
  %v137 = vmul.f32 %v136, 0.0
  %v138 = vadd.f32 %v132, %v137
  %v139 = vadd.f32 %v119, %v138
  %v140 = vxor.u32 %v139, 2147483648
  %v141 = vmul.f32 %v140, 1.442695
  %v142 = vpow.pop %v141
  %v143 = vadd.f32 %v142, 1.0
  %v144 = vrcp.pop %v143
  %v145 = vmul.f32 1.0, %v144
  %v146 = vtanh.pop %v139
  %v147 = vmul.f32 %v145, 0.0
  %149 = vrot.lane.b32.xlu0 %v146, 124
  %v150 = vpop.permute.xlu0 %149
  %v152 = vmul.f32 %v145, %v150
  %154 = vrot.lane.b32.xlu0 %v152, 2
  %v155 = vpop.permute.xlu0 %154
  %v157 = vadd.f32 %v147, %v155
  %v158 = vtanh.pop %v157
  %160 = vrot.lane.b32.xlu0 %v158, 4
  %v161 = vpop.permute.xlu0 %160
  %v163 = vmul.f32 %v145, %v161
  %165 = vset.pattern.permute.xlu0 6
  %166 = vperm.xlu0 %165, %v163
  %v167 = vpop.permute.xlu0 %166
  %v169 = vmul.f32 %v167, %v131
  %170 = vset.pattern.permute.xlu0 7
  %171 = vperm.xlu0 %170, %v163
  %v172 = vpop.permute.xlu0 %171
  %v174 = vmul.f32 %v172, %v136
  %v175 = vadd.f32 %v169, %v174
  %v177 = vrot.slane %v175, 6
  %v179 = vadd.f32 %v119, %v177
  %v180 = vxor.u32 %v179, 2147483648
  %v181 = vmul.f32 %v180, 1.442695
  %v182 = vpow.pop %v181
  %v183 = vadd.f32 %v182, 1.0
  %v184 = vrcp.pop %v183
  %v185 = vmul.f32 1.0, %v184
  %v186 = vtanh.pop %v179
  %v188 = vrot.slane %v157, 6
  %v190 = vmul.f32 %v185, %v188
  %192 = vrot.lane.b32.xlu0 %v186, 124
  %v193 = vpop.permute.xlu0 %192
  %v195 = vmul.f32 %v185, %v193
  %197 = vrot.lane.b32.xlu0 %v195, 2
  %v198 = vpop.permute.xlu0 %197
  %v200 = vadd.f32 %v190, %v198
  %v201 = vtanh.pop %v200
  %203 = vrot.lane.b32.xlu0 %v201, 4
  %v204 = vpop.permute.xlu0 %203
  %v206 = vmul.f32 %v185, %v204
  %208 = vset.pattern.permute.xlu0 6
  %209 = vperm.xlu0 %208, %v206
  %v210 = vpop.permute.xlu0 %209
  %v212 = vmul.f32 %v210, %v131
  %213 = vset.pattern.permute.xlu0 7
  %214 = vperm.xlu0 %213, %v206
  %v215 = vpop.permute.xlu0 %214
  %v217 = vmul.f32 %v215, %v136
  %v218 = vadd.f32 %v212, %v217
  %v220 = vrot.slane %v218, 6
  %v222 = vadd.f32 %v119, %v220
  %v223 = vxor.u32 %v222, 2147483648
  %v224 = vmul.f32 %v223, 1.442695
  %v225 = vpow.pop %v224
  %v226 = vadd.f32 %v225, 1.0
  %v227 = vrcp.pop %v226
  %v228 = vmul.f32 1.0, %v227
  %v229 = vtanh.pop %v222
  %v231 = vrot.slane %v200, 6
  %v233 = vmul.f32 %v228, %v231
  %235 = vrot.lane.b32.xlu0 %v229, 124
  %v236 = vpop.permute.xlu0 %235
  %v238 = vmul.f32 %v228, %v236
  %240 = vrot.lane.b32.xlu0 %v238, 2
  %v241 = vpop.permute.xlu0 %240
  %v243 = vadd.f32 %v233, %v241
  %v244 = vtanh.pop %v243
  %246 = vrot.lane.b32.xlu0 %v244, 4
  %v247 = vpop.permute.xlu0 %246
  %v249 = vmul.f32 %v228, %v247
  %251 = vset.pattern.permute.xlu0 6
  %252 = vperm.xlu0 %251, %v249
  %v253 = vpop.permute.xlu0 %252
  %v255 = vmul.f32 %v253, %v131
  %256 = vset.pattern.permute.xlu0 7
  %257 = vperm.xlu0 %256, %v249
  %v258 = vpop.permute.xlu0 %257
  %v260 = vmul.f32 %v258, %v136
  %v261 = vadd.f32 %v255, %v260
  %v263 = vrot.slane %v261, 6
  %v265 = vadd.f32 %v119, %v263
  %v266 = vxor.u32 %v265, 2147483648
  %v267 = vmul.f32 %v266, 1.442695
  %v268 = vpow.pop %v267
  %v269 = vadd.f32 %v268, 1.0
  %v270 = vrcp.pop %v269
  %v271 = vmul.f32 1.0, %v270
  %v272 = vtanh.pop %v265
  %v274 = vrot.slane %v243, 6
  %v276 = vmul.f32 %v271, %v274
  %278 = vrot.lane.b32.xlu0 %v272, 124
  %v279 = vpop.permute.xlu0 %278
  %v281 = vmul.f32 %v271, %v279
  %283 = vrot.lane.b32.xlu0 %v281, 2
  %v284 = vpop.permute.xlu0 %283
  %v286 = vadd.f32 %v276, %v284
  %v287 = vtanh.pop %v286
  %289 = vrot.lane.b32.xlu0 %v287, 4
  %v290 = vpop.permute.xlu0 %289
  %v292 = vmul.f32 %v271, %v290
  %294 = vset.pattern.permute.xlu0 6
  %295 = vperm.xlu0 %294, %v292
  %v296 = vpop.permute.xlu0 %295
  %v298 = vmul.f32 %v296, %v131
  %299 = vset.pattern.permute.xlu0 7
  %300 = vperm.xlu0 %299, %v292
  %v301 = vpop.permute.xlu0 %300
  %v303 = vmul.f32 %v301, %v136
  %v304 = vadd.f32 %v298, %v303
  %v306 = vrot.slane %v304, 6
  %v308 = vadd.f32 %v124, %v306
  %v309 = vxor.u32 %v308, 2147483648
  %v310 = vmul.f32 %v309, 1.442695
  %v311 = vpow.pop %v310
  %v312 = vadd.f32 %v311, 1.0
  %v313 = vrcp.pop %v312
  %v314 = vmul.f32 1.0, %v313
  %v315 = vtanh.pop %v308
  %v317 = vrot.slane %v286, 6
  %v319 = vmul.f32 %v314, %v317
  %321 = vrot.lane.b32.xlu0 %v315, 124
  %v322 = vpop.permute.xlu0 %321
  %v324 = vmul.f32 %v314, %v322
  %326 = vrot.lane.b32.xlu0 %v324, 2
  %v327 = vpop.permute.xlu0 %326
  %v329 = vadd.f32 %v319, %v327
  %v330 = vtanh.pop %v329
  %332 = vrot.lane.b32.xlu0 %v330, 4
  %v333 = vpop.permute.xlu0 %332
  %v335 = vmul.f32 %v314, %v333
  %337 = vset.pattern.permute.xlu0 6
  %338 = vperm.xlu0 %337, %v335
  %v339 = vpop.permute.xlu0 %338
  %v341 = vmul.f32 %v339, %v131
  %342 = vset.pattern.permute.xlu0 7
  %343 = vperm.xlu0 %342, %v335
  %v344 = vpop.permute.xlu0 %343
  %v346 = vmul.f32 %v344, %v136
  %v347 = vadd.f32 %v341, %v346
  %v349 = vrot.slane %v347, 6
  %v351 = vadd.f32 %v124, %v349
  %v352 = vxor.u32 %v351, 2147483648
  %v353 = vmul.f32 %v352, 1.442695
  %v354 = vpow.pop %v353
  %v355 = vadd.f32 %v354, 1.0
  %v356 = vrcp.pop %v355
  %v357 = vmul.f32 1.0, %v356
  %v358 = vtanh.pop %v351
  %v360 = vrot.slane %v329, 6
  %v362 = vmul.f32 %v357, %v360
  %364 = vrot.lane.b32.xlu0 %v358, 124
  %v365 = vpop.permute.xlu0 %364
  %v367 = vmul.f32 %v357, %v365
  %369 = vrot.lane.b32.xlu0 %v367, 2
  %v370 = vpop.permute.xlu0 %369
  %v372 = vadd.f32 %v362, %v370
  %v373 = vtanh.pop %v372
  %375 = vrot.lane.b32.xlu0 %v373, 4
  %v376 = vpop.permute.xlu0 %375
  %v378 = vmul.f32 %v357, %v376
  %380 = vset.pattern.permute.xlu0 6
  %381 = vperm.xlu0 %380, %v378
  %v382 = vpop.permute.xlu0 %381
  %v384 = vmul.f32 %v382, %v131
  %385 = vset.pattern.permute.xlu0 7
  %386 = vperm.xlu0 %385, %v378
  %v387 = vpop.permute.xlu0 %386
  %v389 = vmul.f32 %v387, %v136
  %v390 = vadd.f32 %v384, %v389
  %v392 = vrot.slane %v390, 6
  %v394 = vadd.f32 %v124, %v392
  %v395 = vxor.u32 %v394, 2147483648
  %v396 = vmul.f32 %v395, 1.442695
  %v397 = vpow.pop %v396
  %v398 = vadd.f32 %v397, 1.0
  %v399 = vrcp.pop %v398
  %v400 = vmul.f32 1.0, %v399
  %v401 = vtanh.pop %v394
  %v403 = vrot.slane %v372, 6
  %v405 = vmul.f32 %v400, %v403
  %407 = vrot.lane.b32.xlu0 %v401, 124
  %v408 = vpop.permute.xlu0 %407
  %v410 = vmul.f32 %v400, %v408
  %412 = vrot.lane.b32.xlu0 %v410, 2
  %v413 = vpop.permute.xlu0 %412
  %v415 = vadd.f32 %v405, %v413
  %v416 = vtanh.pop %v415
  %418 = vrot.lane.b32.xlu0 %v416, 4
  %v419 = vpop.permute.xlu0 %418
  %v421 = vmul.f32 %v400, %v419
  %423 = vset.pattern.permute.xlu0 6
  %424 = vperm.xlu0 %423, %v421
  %v425 = vpop.permute.xlu0 %424
  %v427 = vmul.f32 %v425, %v131
  %428 = vset.pattern.permute.xlu0 7
  %429 = vperm.xlu0 %428, %v421
  %v430 = vpop.permute.xlu0 %429
  %v432 = vmul.f32 %v430, %v136
  %v433 = vadd.f32 %v427, %v432
  %v435 = vrot.slane %v433, 6
  %v437 = vadd.f32 %v124, %v435
  %v438 = vxor.u32 %v437, 2147483648
  %v439 = vmul.f32 %v438, 1.442695
  %v440 = vpow.pop %v439
  %v441 = vadd.f32 %v440, 1.0
  %v442 = vrcp.pop %v441
  %v443 = vmul.f32 1.0, %v442
  %v444 = vtanh.pop %v437
  %v446 = vrot.slane %v415, 6
  %v448 = vmul.f32 %v443, %v446
  %450 = vrot.lane.b32.xlu0 %v444, 124
  %v451 = vpop.permute.xlu0 %450
  %v453 = vmul.f32 %v443, %v451
  %455 = vrot.lane.b32.xlu0 %v453, 2
  %v456 = vpop.permute.xlu0 %455
  %v458 = vadd.f32 %v448, %v456
  %v459 = vtanh.pop %v458
  %461 = vrot.lane.b32.xlu0 %v459, 4
  %v462 = vpop.permute.xlu0 %461
  %v464 = vmul.f32 %v443, %v462
  %v465 = vmax.f32 %v464, 0.0
  %v466 = vld [vmem:[%s4] sm:$0x3]
  %v467 = vld [vmem:[%s5] sm:$0x1]
  %v469 = vlaneseq
  %v470 = vshrl.u32 %v469, 7
  %v471 = vsub.s32 0, %v470
  %v472 = vrot.slane %v467, %v471
  %v475 = vrot.slane %v465, 6
  %476 = vrot.lane.b32.xlu0 %v475, 122
  %v477 = vpop.permute.xlu0 %476
  %vm478 = vcmask 15360
  %v479 = vsel %vm478, %v477, 0
  %vm481 = vcmask 1041408
  %v483 = vsel %vm481, %v466, 0
  %485 = vmatprep.subr.mxu0 0.0
  %486 = vmatpush1.msra.mxu0 0.0
  %487 = vmatprep.subr.mxu0 0.0
  %488 = vmatpush1.msra.mxu0 0.0
  %489 = vmatprep.subr.mxu0 0.0
  %490 = vmatpush1.msra.mxu0 0.0
  %491 = vmatprep.subr.mxu0 0.0
  %492 = vmatpush1.msra.mxu0 0.0
  %493 = vmatprep.subr.mxu0 0.0
  %494 = vmatpush1.msra.mxu0 0.0
  %495 = vmatprep.subr.mxu0 0.0
  %496 = vmatpush1.msra.mxu0 0.0
  %497 = vmatprep.subr.mxu0 0.0
  %498 = vmatpush1.msra.mxu0 0.0
  %499 = vmatprep.subr.mxu0 0.0
  %500 = vmatpush1.msra.mxu0 0.0
  %501 = vmatprep.subr.mxu0 0.0
  %502 = vmatpush1.msra.mxu0 0.0
  %503 = vmatprep.subr.mxu0 0.0
  %504 = vmatpush1.msra.mxu0 0.0
  %505 = vmatprep.subr.mxu0 0.0
  %506 = vmatpush1.msra.mxu0 0.0
  %507 = vmatprep.subr.mxu0 0.0
  %508 = vmatpush1.msra.mxu0 0.0
  %509 = vmatprep.subr.mxu0 0.0
  %510 = vmatpush1.msra.mxu0 0.0
  %511 = vmatprep.subr.mxu0 0.0
  %512 = vmatpush1.msra.mxu0 0.0
  %513 = vmatprep.subr.mxu0 0.0
  %514 = vmatpush1.msra.mxu0 0.0
  %515 = vmatprep.subr.mxu0 0.0
  %516 = vmatpush1.msra.mxu0 %v483
  %517 = vmatprep.subr.mxu0 0.0
  %518 = vmatpush2.msra.mxu0 0.0
  %519 = vmatprep.subr.mxu0 0.0
  %520 = vmatpush2.msra.mxu0 0.0
  %521 = vmatprep.subr.mxu0 0.0
  %522 = vmatpush2.msra.mxu0 0.0
  %523 = vmatprep.subr.mxu0 0.0
  %524 = vmatpush2.msra.mxu0 0.0
  %525 = vmatprep.subr.mxu0 0.0
  %526 = vmatpush2.msra.mxu0 0.0
  %527 = vmatprep.subr.mxu0 0.0
  %528 = vmatpush2.msra.mxu0 0.0
  %529 = vmatprep.subr.mxu0 0.0
  %530 = vmatpush2.msra.mxu0 0.0
  %531 = vmatprep.subr.mxu0 0.0
  %532 = vmatpush2.msra.mxu0 0.0
  %533 = vmatprep.subr.mxu0 0.0
  %534 = vmatpush2.msra.mxu0 0.0
  %535 = vmatprep.subr.mxu0 0.0
  %536 = vmatpush2.msra.mxu0 0.0
  %537 = vmatprep.subr.mxu0 0.0
  %538 = vmatpush2.msra.mxu0 0.0
  %539 = vmatprep.subr.mxu0 0.0
  %540 = vmatpush2.msra.mxu0 0.0
  %541 = vmatprep.subr.mxu0 0.0
  %542 = vmatpush2.msra.mxu0 0.0
  %543 = vmatprep.subr.mxu0 0.0
  %544 = vmatpush2.msra.mxu0 0.0
  %545 = vmatprep.subr.mxu0 0.0
  %546 = vmatpush2.msra.mxu0 0.0
  %547 = vmatprep.subr.mxu0 0.0
  %548 = vmatpush2.msra.mxu0 0.0
  %549 = vmatprep.mubr.f32.mxu0 0.0
  %550 = vmatmul.mubr.f32.gmra.mxu0 %v479
  %v551 = vpop.f32.mrf.mxu0
  %v552 = vadd.f32 %v472, %v551
  %v553 = vpop.f32.mrf.mxu0
  %554 = vdwg.mxu0
  %v555 = vmax.f32 %v552, 0.0
  %v556 = vld [vmem:[%s6] sm:$0x1]
  %v558 = vlaneseq
  %v559 = vshrl.u32 %v558, 7
  %v560 = vsub.s32 0, %v559
  %v561 = vrot.slane %v556, %v560
  %v563 = vmul.f32 %v555, %v561
  %v564 = vsel %vm481, %v563, 0.0
  %565 = vadd.xlane.f32.xlu0 %v564
  %v566 = vpop.xlane.xlu0 %565
  %v567 = vld [vmem:[#allocation2] sm:$0x1]
  %v569 = vlaneseq
  %v570 = vshrl.u32 %v569, 7
  %v571 = vsub.s32 0, %v570
  %v572 = vrot.slane %v567, %v571
  %v574 = vadd.f32 %v566, %v572
  %vm575 = vcmask 1024
  %576 = vst.msk [vmem:[%s8] sm:$0x3] %vm575, %v574
  // Predicated region
  $region34: #{tpu_custom_call.1} parent=0 // pred_check
    _
  $region35: #{tpu_custom_call.1} parent=0 // pred_check_branch
    %578 = sbr.rel (0) target = $region37
  $region36: #{tpu_custom_call.1} parent=0 // pred_region
    _
  $region37: #{tpu_custom_call.1} parent=0 // pred_fallthru
    _
  // Predicated region
  $region38: #{tpu_custom_call.1} parent=0 // pred_check
    _
  $region39: #{tpu_custom_call.1} parent=0 // pred_check_branch
    %580 = sbr.rel (0) target = $region41
  $region40: #{tpu_custom_call.1} parent=0 // pred_region
    _
  $region41: #{tpu_custom_call.1} parent=0 // pred_fallthru
    _

</llo_original>
